<compile_context>
chip_gen: v7x
topology: tpu7x:2x2x1
jax: 0.10.0
libtpu: 0.0.40
codegen_flags: <defaults>
</compile_context>

<pallas_src>
import functools

import jax
import jax.numpy as jnp
from jax.experimental import pallas as pl
from jax.experimental.pallas import tpu as pltpu


def _round_up(x, m):
    return (x + m - 1) // m * m


def _vmem_ceiling_bytes():
    # Generation-aware VMEM cap with headroom for compiler internal scratch /
    # pipeline metadata (v5e/v6e: 128 MiB physical; v7x: 64 MiB physical).
    try:
        cap = pltpu.get_tpu_info().vmem_capacity_bytes
    except Exception:
        cap = 64 << 20
    return int(cap * 0.85)


def _query_emb_kernel(q_ref, emb_ref, *rest, needs_mask):
    """One (row-tile, vocab-tile) grid step of the online-softmax attention."""
    if needs_mask:
        bias_ref, o_ref, m_sc, l_sc, acc_sc = rest
    else:
        o_ref, m_sc, l_sc, acc_sc = rest
        bias_ref = None

    v_idx = pl.program_id(1)

    @pl.when(v_idx == 0)
    def _():
        m_sc[...] = jnp.full_like(m_sc, -jnp.inf)
        l_sc[...] = jnp.zeros_like(l_sc)
        acc_sc[...] = jnp.zeros_like(acc_sc)

    q_f32 = q_ref[...]                       # [M_TILE, D_pad], f32 (residual)
    q_bf = q_f32.astype(jnp.bfloat16)        # MXU operand
    emb = emb_ref[...]                       # [V_TILE, D_pad], bf16

    # logits = q @ emb^T, contracting the shared D axis directly (NT form, the
    # same contraction the reference flash-attention kernel uses; no
    # materialized transpose of the emb tile). bf16 in, f32 accumulate.
    logits = jax.lax.dot_general(
        q_bf, emb, (((1,), (1,)), ((), ())),
        preferred_element_type=jnp.float32)          # [M_TILE, V_TILE]

    if needs_mask:
        # Single vadd per vreg: additive bias (0 on valid vocab rows, -1e30 on
        # padded rows) streamed as a (1, v_tile) block.
        logits = logits + bias_ref[...]

    # Online softmax update.
    m_prev = m_sc[...]
    m_new = jnp.maximum(m_prev, jnp.max(logits, axis=-1, keepdims=True))
    alpha = jnp.exp(m_prev - m_new)                  # 0.0 on the first tile
    p = jnp.exp(logits - m_new)                      # f32 exp (portable to v5e)
    l_sc[...] = alpha * l_sc[...] + jnp.sum(p, axis=-1, keepdims=True)
    # Second matmul in bf16 (p is in [0, 1]; accuracy loss negligible), f32 acc.
    acc_sc[...] = alpha * acc_sc[...] + jnp.dot(
        p.astype(jnp.bfloat16), emb, preferred_element_type=jnp.float32)
    m_sc[...] = m_new

    @pl.when(v_idx == pl.num_programs(1) - 1)
    def _():
        # Fold the softmax denominator after the second matmul: scale the
        # [M, D] accumulator instead of the [M, V] probabilities.  Exact
        # reciprocal: this runs once per row tile (cold path), so the EUP
        # approximation would save nothing and only cost accuracy.
        inv_l = pl.reciprocal(l_sc[...], approx=False)
        o_ref[...] = (acc_sc[...] * inv_l + q_f32).astype(o_ref.dtype)


def make_query_emb(emb_matrix, *, m_tile=512, v_tile=2048):
    """Set up a QueryEmb forward for a fixed [V, D] embedding table.

    Pads / casts the table exactly once (hoisted out of the per-call wrapper)
    and returns `forward(q)` computing eval-mode QueryEmb: [B, L, D] -> [B, L, D].
    """
    V, D = emb_matrix.shape

    # Lane-dense padding: last dims multiples of 128.
    D_pad = _round_up(D, 128)
    v_tile_eff = min(v_tile, _round_up(V, 128))
    V_pad = _round_up(V, v_tile_eff)
    needs_mask = V_pad != V

    # Pad + cast to bf16 once at parameter-setup time: bf16 MXU operands and
    # half the streamed HBM bytes for the table.
    emb_pad = jnp.pad(
        emb_matrix.astype(jnp.float32),
        ((0, V_pad - V), (0, D_pad - D))).astype(jnp.bfloat16)

    if needs_mask:
        vocab_bias = jnp.where(
            jnp.arange(V_pad)[None, :] < V, 0.0, -1e30).astype(jnp.float32)
    else:
        vocab_bias = None

    kernel = functools.partial(_query_emb_kernel, needs_mask=needs_mask)

    def forward(q):
        B, L, Dq = q.shape
        assert Dq == D
        M = B * L

        # Row tile: multiple of 8 sublanes.  Force >= 2 row tiles when
        # possible so the "parallel" axis can be sharded across both v7x
        # TensorCores (only costs an extra emb sweep when M fits one tile,
        # i.e. when the whole problem is tiny anyway).
        m_tile_eff = min(m_tile, _round_up(M, 8))
        while m_tile_eff > 8 and pl.cdiv(M, m_tile_eff) < 2:
            m_tile_eff = _round_up(m_tile_eff // 2, 8)
        M_pad = _round_up(M, m_tile_eff)

        q_flat = jnp.pad(
            q.reshape(M, D).astype(jnp.float32),
            ((0, M_pad - M), (0, D_pad - D)))

        grid = (M_pad // m_tile_eff, V_pad // v_tile_eff)

        # VMEM budget (double-buffered q/emb/out tiles + scratch + [M,V] temps).
        f32b, bf16b = 4, 2
        vmem_bytes = (
            2 * m_tile_eff * D_pad * f32b          # q tiles (double-buffered)
            + 2 * v_tile_eff * D_pad * bf16b       # emb tiles (double-buffered, bf16)
            + 2 * m_tile_eff * D_pad * f32b        # out tiles (double-buffered)
            + m_tile_eff * D_pad * f32b            # ctx accumulator scratch
            + 2 * m_tile_eff * f32b                # running max / denom scratch
            + 4 * m_tile_eff * v_tile_eff * f32b   # logits / p temporaries + headroom
            + (2 * 1 * v_tile_eff * f32b if needs_mask else 0)  # bias tiles
        )
        vmem_limit = int(min(max(vmem_bytes, 16 << 20), _vmem_ceiling_bytes()))

        cost = pl.CostEstimate(
            flops=4 * M_pad * V_pad * D_pad,                   # two matmuls
            transcendentals=M_pad * V_pad,                     # exp over logits
            bytes_accessed=(2 * M_pad * D_pad * f32b           # q in, out (f32)
                            + grid[0] * V_pad * D_pad * bf16b  # emb streamed per row tile
                            ),
        )

        in_specs = [
            # q row tile: resident across the V reduction axis.
            pl.BlockSpec((m_tile_eff, D_pad), lambda m, v: (m, 0)),
            # emb tile: streams along the V axis.
            pl.BlockSpec((v_tile_eff, D_pad), lambda m, v: (v, 0)),
        ]
        args = [q_flat, emb_pad]
        if needs_mask:
            in_specs.append(pl.BlockSpec((1, v_tile_eff), lambda m, v: (0, v)))
            args.append(vocab_bias)

        out_pad = pl.pallas_call(
            kernel,
            out_shape=jax.ShapeDtypeStruct((M_pad, D_pad), q.dtype),
            grid_spec=pltpu.PrefetchScalarGridSpec(
                num_scalar_prefetch=0,
                grid=grid,
                in_specs=in_specs,
                out_specs=pl.BlockSpec((m_tile_eff, D_pad), lambda m, v: (m, 0)),
                scratch_shapes=[
                    pltpu.VMEM((m_tile_eff, 1), jnp.float32),      # running max
                    pltpu.VMEM((m_tile_eff, 1), jnp.float32),      # running denom
                    pltpu.VMEM((m_tile_eff, D_pad), jnp.float32),  # unnormalized ctx
                ],
            ),
            compiler_params=pltpu.CompilerParams(
                dimension_semantics=("parallel", "arbitrary"),
                vmem_limit_bytes=vmem_limit,
            ),
            cost_estimate=cost,
        )(*args)

        return out_pad[:M, :D].reshape(B, L, D)

    return forward


def reference_forward(q, emb_matrix):
    logits = jnp.einsum("bld,vd->blv", q, emb_matrix)
    attn = jax.nn.softmax(logits, axis=-1)
    ctx = jnp.einsum("blv,vd->bld", attn, emb_matrix)
    return ctx + q


if __name__ == "__main__":
    # Small, module-consistent shapes.
    B, L, D, V = 2, 8, 32, 16

    key = jax.random.PRNGKey(0)
    kq, kemb = jax.random.split(key)

    q = jax.random.normal(kq, (B, L, D), dtype=jnp.float32)
    # Deterministic init matching torch.ones(V, D).uniform_(-0.1, 0.1)
    emb_matrix = jax.random.uniform(
        kemb, (V, D), dtype=jnp.float32, minval=-0.1, maxval=0.1
    )

    query_emb = make_query_emb(emb_matrix)
    out = query_emb(q)
    out = jax.block_until_ready(out)

    ref = reference_forward(q, emb_matrix)
    assert out.shape == (B, L, D)
    # Tolerance accounts for the bf16 MXU operands in both matmuls (the
    # softmax accumulators and the residual stay in f32).
    assert jnp.allclose(out, ref, atol=1e-2, rtol=1e-2), "mismatch vs reference"

    print("KERNEL_OK")
</pallas_src>

<mosaic_0001>
module attributes {stable_mosaic.version = 11 : i64} {
  func.func @_query_emb_kernel(%arg0: i32, %arg1: i32, %arg2: memref<8x128xf32, #tpu.memory_space<vmem>>, %arg3: memref<128x128xbf16, #tpu.memory_space<vmem>>, %arg4: memref<1x128xf32, #tpu.memory_space<vmem>>, %arg5: memref<8x128xf32, #tpu.memory_space<vmem>>, %arg6: memref<8x1xf32, #tpu.memory_space<vmem>>, %arg7: memref<8x1xf32, #tpu.memory_space<vmem>>, %arg8: memref<8x128xf32, #tpu.memory_space<vmem>>) attributes {dimension_semantics = [#tpu.dimension_semantics<parallel>, #tpu.dimension_semantics<arbitrary>], iteration_bounds = array<i64: 2, 1>, scalar_prefetch = 0 : i64, scratch_operands = 3 : i64, tpu.core_type = #tpu.core_type<tc>, window_params = [{transform_indices = @transform_0, window_bounds = array<i64: 8, 128>}, {transform_indices = @transform_1, window_bounds = array<i64: 128, 128>}, {transform_indices = @transform_2, window_bounds = array<i64: 1, 128>}, {transform_indices = @transform_3, window_bounds = array<i64: 8, 128>}]} {
    %c0_i32 = arith.constant 0 : i32
    %0 = arith.cmpi eq, %arg1, %c0_i32 : i32
    %1 = arith.extui %0 : i1 to i32
    %c0_i32_0 = arith.constant 0 : i32
    %2 = arith.cmpi ne, %1, %c0_i32_0 : i32
    scf.if %2 {
      %cst_23 = arith.constant 0xFF800000 : f32
      %36 = vector.broadcast %cst_23 : f32 to vector<8x1xf32>
      %c0_24 = arith.constant 0 : index
      %c0_25 = arith.constant 0 : index
      %37 = vector.load %arg6[%c0_24, %c0_25] : memref<8x1xf32, #tpu.memory_space<vmem>>, vector<8x1xf32>
      tpu.vector_store %arg6[%c0_24, %c0_25], %36 {strides = array<i32>} : memref<8x1xf32, #tpu.memory_space<vmem>>, vector<8x1xf32>,
      %cst_26 = arith.constant 0.000000e+00 : f32
      %38 = vector.broadcast %cst_26 : f32 to vector<8x1xf32>
      %c0_27 = arith.constant 0 : index
      %c0_28 = arith.constant 0 : index
      %39 = vector.load %arg7[%c0_27, %c0_28] : memref<8x1xf32, #tpu.memory_space<vmem>>, vector<8x1xf32>
      tpu.vector_store %arg7[%c0_27, %c0_28], %38 {strides = array<i32>} : memref<8x1xf32, #tpu.memory_space<vmem>>, vector<8x1xf32>,
      %cst_29 = arith.constant 0.000000e+00 : f32
      %40 = vector.broadcast %cst_29 : f32 to vector<8x128xf32>
      %c0_30 = arith.constant 0 : index
      %c0_31 = arith.constant 0 : index
      %41 = vector.load %arg8[%c0_30, %c0_31] : memref<8x128xf32, #tpu.memory_space<vmem>>, vector<8x128xf32>
      tpu.vector_store %arg8[%c0_30, %c0_31], %40 {strides = array<i32>} : memref<8x128xf32, #tpu.memory_space<vmem>>, vector<8x128xf32>,
    } else {
    }
    %c0 = arith.constant 0 : index
    %c0_1 = arith.constant 0 : index
    %3 = vector.load %arg2[%c0, %c0_1] : memref<8x128xf32, #tpu.memory_space<vmem>>, vector<8x128xf32>
    %4 = arith.truncf %3 : vector<8x128xf32> to vector<8x128xbf16>
    %c0_2 = arith.constant 0 : index
    %c0_3 = arith.constant 0 : index
    %5 = vector.load %arg3[%c0_2, %c0_3] : memref<128x128xbf16, #tpu.memory_space<vmem>>, vector<128x128xbf16>
    %cst = arith.constant dense<0.000000e+00> : vector<8x128xf32>
    %6 = tpu.matmul %4, %5, %cst {dimension_numbers = #tpu.dot_dimension_numbers<[1], [1], [0], [0], [0, 0, 1, 0], [], []>} : vector<8x128xbf16>, vector<128x128xbf16>, vector<8x128xf32> -> vector<8x128xf32>
    %c0_4 = arith.constant 0 : index
    %c0_5 = arith.constant 0 : index
    %7 = vector.load %arg4[%c0_4, %c0_5] : memref<1x128xf32, #tpu.memory_space<vmem>>, vector<1x128xf32>
    %8 = vector.broadcast %7 : vector<1x128xf32> to vector<8x128xf32>
    %9 = arith.addf %6, %8 : vector<8x128xf32>
    %c0_6 = arith.constant 0 : index
    %c0_7 = arith.constant 0 : index
    %10 = vector.load %arg6[%c0_6, %c0_7] : memref<8x1xf32, #tpu.memory_space<vmem>>, vector<8x1xf32>
    %cst_8 = arith.constant dense<0xFF800000> : vector<8xf32>
    %11 = vector.multi_reduction <maximumf>, %9, %cst_8 [1] : vector<8x128xf32> to vector<8xf32>
    %12 = vector.shape_cast %11 : vector<8xf32> to vector<8x1xf32>
    %13 = arith.maximumf %10, %12 : vector<8x1xf32>
    %14 = arith.subf %10, %13 : vector<8x1xf32>
    %15 = math.exp %14 : vector<8x1xf32>
    %16 = vector.broadcast %13 : vector<8x1xf32> to vector<8x128xf32>
    %17 = arith.subf %9, %16 : vector<8x128xf32>
    %18 = math.exp %17 : vector<8x128xf32>
    %c0_9 = arith.constant 0 : index
    %c0_10 = arith.constant 0 : index
    %19 = vector.load %arg7[%c0_9, %c0_10] : memref<8x1xf32, #tpu.memory_space<vmem>>, vector<8x1xf32>
    %20 = arith.mulf %15, %19 : vector<8x1xf32>
    %cst_11 = arith.constant dense<0.000000e+00> : vector<8xf32>
    %21 = vector.multi_reduction <add>, %18, %cst_11 [1] : vector<8x128xf32> to vector<8xf32>
    %22 = vector.shape_cast %21 : vector<8xf32> to vector<8x1xf32>
    %23 = arith.addf %20, %22 : vector<8x1xf32>
    %c0_12 = arith.constant 0 : index
    %c0_13 = arith.constant 0 : index
    %24 = vector.load %arg7[%c0_12, %c0_13] : memref<8x1xf32, #tpu.memory_space<vmem>>, vector<8x1xf32>
    tpu.vector_store %arg7[%c0_12, %c0_13], %23 {strides = array<i32>} : memref<8x1xf32, #tpu.memory_space<vmem>>, vector<8x1xf32>,
    %c0_14 = arith.constant 0 : index
    %c0_15 = arith.constant 0 : index
    %25 = vector.load %arg8[%c0_14, %c0_15] : memref<8x128xf32, #tpu.memory_space<vmem>>, vector<8x128xf32>
    %26 = vector.broadcast %15 : vector<8x1xf32> to vector<8x128xf32>
    %27 = arith.mulf %26, %25 : vector<8x128xf32>
    %28 = arith.truncf %18 : vector<8x128xf32> to vector<8x128xbf16>
    %cst_16 = arith.constant dense<0.000000e+00> : vector<8x128xf32>
    %29 = tpu.matmul %28, %5, %cst_16 {dimension_numbers = #tpu.dot_dimension_numbers<[1], [0], [0], [1], [0, 0, 1, 1], [], []>} : vector<8x128xbf16>, vector<128x128xbf16>, vector<8x128xf32> -> vector<8x128xf32>
    %30 = arith.addf %27, %29 : vector<8x128xf32>
    %c0_17 = arith.constant 0 : index
    %c0_18 = arith.constant 0 : index
    %31 = vector.load %arg8[%c0_17, %c0_18] : memref<8x128xf32, #tpu.memory_space<vmem>>, vector<8x128xf32>
    tpu.vector_store %arg8[%c0_17, %c0_18], %30 {strides = array<i32>} : memref<8x128xf32, #tpu.memory_space<vmem>>, vector<8x128xf32>,
    %c0_19 = arith.constant 0 : index
    %c0_20 = arith.constant 0 : index
    %32 = vector.load %arg6[%c0_19, %c0_20] : memref<8x1xf32, #tpu.memory_space<vmem>>, vector<8x1xf32>
    tpu.vector_store %arg6[%c0_19, %c0_20], %13 {strides = array<i32>} : memref<8x1xf32, #tpu.memory_space<vmem>>, vector<8x1xf32>,
    %c0_i32_21 = arith.constant 0 : i32
    %33 = arith.cmpi eq, %arg1, %c0_i32_21 : i32
    %34 = arith.extui %33 : i1 to i32
    %c0_i32_22 = arith.constant 0 : i32
    %35 = arith.cmpi ne, %34, %c0_i32_22 : i32
    scf.if %35 {
      %c0_23 = arith.constant 0 : index
      %c0_24 = arith.constant 0 : index
      %36 = vector.load %arg7[%c0_23, %c0_24] : memref<8x1xf32, #tpu.memory_space<vmem>>, vector<8x1xf32>
      %37 = tpu.reciprocal %36 : vector<8x1xf32> -> vector<8x1xf32>
      %c0_25 = arith.constant 0 : index
      %c0_26 = arith.constant 0 : index
      %38 = vector.load %arg8[%c0_25, %c0_26] : memref<8x128xf32, #tpu.memory_space<vmem>>, vector<8x128xf32>
      %39 = vector.broadcast %37 : vector<8x1xf32> to vector<8x128xf32>
      %40 = arith.mulf %38, %39 : vector<8x128xf32>
      %41 = arith.addf %40, %3 : vector<8x128xf32>
      %c0_27 = arith.constant 0 : index
      %c0_28 = arith.constant 0 : index
      %42 = vector.load %arg5[%c0_27, %c0_28] : memref<8x128xf32, #tpu.memory_space<vmem>>, vector<8x128xf32>
      tpu.vector_store %arg5[%c0_27, %c0_28], %41 {strides = array<i32>} : memref<8x128xf32, #tpu.memory_space<vmem>>, vector<8x128xf32>,
    } else {
    }
    return
  }
  func.func @transform_0(%arg0: i32, %arg1: i32) -> (i32, i32) {
    %c0_i32 = arith.constant 0 : i32
    %c0_i32_0 = arith.constant 0 : i32
    return %arg0, %c0_i32 : i32, i32
  }
  func.func @transform_1(%arg0: i32, %arg1: i32) -> (i32, i32) {
    %c0_i32 = arith.constant 0 : i32
    %c0_i32_0 = arith.constant 0 : i32
    return %arg1, %c0_i32 : i32, i32
  }
  func.func @transform_2(%arg0: i32, %arg1: i32) -> (i32, i32) {
    %c0_i32 = arith.constant 0 : i32
    %c0_i32_0 = arith.constant 0 : i32
    return %c0_i32, %arg1 : i32, i32
  }
  func.func @transform_3(%arg0: i32, %arg1: i32) -> (i32, i32) {
    %c0_i32 = arith.constant 0 : i32
    %c0_i32_0 = arith.constant 0 : i32
    return %arg0, %c0_i32 : i32, i32
  }
}

</mosaic_0001>

<llo_original>
// kernel: tpu_custom_call.1
$region0: #{tpu_custom_call.1}
  #allocation0 [shape = 'u32[]', space=smem, size = 0x4, offset = 0x4, fixed_abs, tag = 'smem constant byte address 0x4 - core index']
  #allocation1 [shape = 'u32[144,128]{1,0:T(1,128)}', space=vmem, size = 0x12000, scoped, tag = 'internal scratch']
  #allocation2 [shape = 'f32[8,1]{1,0:T(8,128)}', space=vmem, size = 0x1000, scoped, tag = 'scratch operand']
  #allocation3 [shape = 'f32[8,1]{1,0:T(8,128)}', space=vmem, size = 0x1000, scoped, tag = 'scratch operand']
  #allocation4 [shape = 'f32[8,128]{1,0:T(8,128)}', space=vmem, size = 0x1000, scoped, tag = 'scratch operand']
  %s0 = inlined_call_operand.hbm [shape: f32[16,128], index: 0, kind: input, shape index: {}]
  %s1 = inlined_call_operand.hbm [shape: bf16[128,128], index: 1, kind: input, shape index: {}]
  %s2 = inlined_call_operand.vmem [shape: f32[1,128], index: 2, kind: input, shape index: {}]
  %s3 = inlined_call_operand.hbm [shape: f32[16,128], index: 3, kind: output, shape index: {}]
  %s4 = sld [smem:[#allocation0]]
  $region61: #{tpu_custom_call.1} parent=0
    _
  %s6 = ssub.s32 1, %s4
  %s7 = scalar_select 0, %s6, %s4
  $region1: #{tpu_custom_call.1} parent=0
    #allocation5 [shape = 'u8[8192]{0}', space=vmem, size = 0x2000, scoped, tag = 'input window, operand 0']
    #allocation6 [shape = 's32[2]{0}', space=sflag, size = 0x8, scoped, tag = 'scoped memory for tpu_custom_call.1']
    #allocation7 [shape = 's32[2]{0}', space=sflag, size = 0x8, scoped, tag = 'scoped memory for tpu_custom_call.1']
    #allocation8 [shape = 'u8[32768]{0}', space=vmem, size = 0x8000, scoped, tag = 'input window, operand 1, single buffered']
    #allocation9 [shape = 's32[1]{0}', space=sflag, size = 0x4, scoped, tag = 'scoped memory for tpu_custom_call.1']
    #allocation10 [shape = 'u8[8192]{0}', space=vmem, size = 0x2000, scoped, tag = 'output window, operand 0']
    %8 = vsyncpa [#allocation6], 0
    %s9 = scalar_lea.sflag [#allocation6], 1
    %10 = vsyncpa %s9, 0
    %11 = vsyncpa [#allocation9], 0
    %12 = vsyncpa [#allocation7], 0
    %s13 = scalar_lea.sflag [#allocation7], 1
    %14 = vsyncpa %s13, 0
    loop: start=0, step=1, limit=4
    $region2: #{tpu_custom_call.1} parent=1 // loop_pre_header
      _
    $region3: #{tpu_custom_call.1} parent=1 // loop_header
      %s16 = sphi 0, %s20
      %p17 = scmp.ge.s32.totalorder %s16, 4
      %s23 = sphi 0, %s35
      %s24 = sphi 0, %s31
      %s25 = sphi 0, %s23
      %s26 = sphi 0, %s24
      %s27 = sphi 0, %s25
      %s28 = sphi 0, %s26
      %s38 = sphi 0, %s40
      %s41 = sphi 0, %s38
      %s42 = sphi 0, %s41
      %s58 = sphi 0, %s42
      %s64 = sphi 0, %s66
      %s67 = sphi 0, %s64
      %s68 = sphi 0, %s67
      %s84 = sphi 0, %s68
      %s90 = sphi 0, %s92
      %s93 = sphi 0, %s90
      %s94 = sphi 0, %s93
      %s110 = sphi 0, %s94
      %s116 = sphi 0, %s118
      %s119 = sphi 0, %s116
      %s120 = sphi 0, %s119
      %s136 = sphi 0, %s120
    $region4: #{tpu_custom_call.1} parent=1 // loop_header_branch
      %19 = sbr.rel (%p17) target = $region8
    $region5: #{tpu_custom_call.1} parent=1 // loop_body
      %s21 = ssub.s32 %s16, 1
      %s22 = ssub.s32 %s16, 2
      %s29 = sadd.s32 1, %s24
      %p30 = scmp.ge.s32.totalorder %s29, 1
      %s31 = scalar_select %p30, 0, %s29
      %s32 = sadd.s32 1, %s23
      %s33 = scalar_select %p30, %s32, %s23
      %p34 = scmp.ge.s32.totalorder %s33, 2
      %s35 = scalar_select %p34, 0, %s33
      %s36 = ssub.s32 %s23, %s35
      %p37 = scmp.eq.s32.totalorder %s36, 0
      %s39 = sadd.s32 %s38, 1
      %s40 = scalar_select %p37, %s38, %s39
      %p43 = pneg %p37
      %p44 = scmp.eq.s32.totalorder %s16, 1
      %p45 = por %p43, %p44
      %p46 = scmp.ne.s32.totalorder %s38, %s41
      %p47 = scmp.eq.s32.totalorder %s16, 0
      %p48 = por %p46, %p47
      %p49 = scmp.ne.s32.totalorder %s38, %s41
      %p50 = scmp.eq.s32.totalorder %s21, 1
      %p51 = por %p49, %p50
      %p52 = scmp.ne.s32.totalorder %s41, %s42
      %p53 = scmp.eq.s32.totalorder %s21, 0
      %p54 = por %p52, %p53
      %p55 = scmp.ne.s32.totalorder %s41, %s42
      %p56 = scmp.eq.s32.totalorder %s22, 1
      %p57 = por %p55, %p56
      %p59 = scmp.ne.s32.totalorder %s42, %s58
      %p60 = scmp.eq.s32.totalorder %s22, 0
      %p61 = por %p59, %p60
      %s62 = ssub.s32 %s24, %s31
      %p63 = scmp.eq.s32.totalorder %s62, 0
      %s65 = sadd.s32 %s64, 1
      %s66 = scalar_select %p63, %s64, %s65
      %p69 = pneg %p63
      %p70 = scmp.eq.s32.totalorder %s16, 1
      %p71 = por %p69, %p70
      %p72 = scmp.ne.s32.totalorder %s64, %s67
      %p73 = scmp.eq.s32.totalorder %s16, 0
      %p74 = por %p72, %p73
      %p75 = scmp.ne.s32.totalorder %s64, %s67
      %p76 = scmp.eq.s32.totalorder %s21, 1
      %p77 = por %p75, %p76
      %p78 = scmp.ne.s32.totalorder %s67, %s68
      %p79 = scmp.eq.s32.totalorder %s21, 0
      %p80 = por %p78, %p79
      %p81 = scmp.ne.s32.totalorder %s67, %s68
      %p82 = scmp.eq.s32.totalorder %s22, 1
      %p83 = por %p81, %p82
      %p85 = scmp.ne.s32.totalorder %s68, %s84
      %p86 = scmp.eq.s32.totalorder %s22, 0
      %p87 = por %p85, %p86
      %s88 = ssub.s32 %s24, %s31
      %p89 = scmp.eq.s32.totalorder %s88, 0
      %s91 = sadd.s32 %s90, 1
      %s92 = scalar_select %p89, %s90, %s91
      %p95 = pneg %p89
      %p96 = scmp.eq.s32.totalorder %s16, 1
      %p97 = por %p95, %p96
      %p98 = scmp.ne.s32.totalorder %s90, %s93
      %p99 = scmp.eq.s32.totalorder %s16, 0
      %p100 = por %p98, %p99
      %p101 = scmp.ne.s32.totalorder %s90, %s93
      %p102 = scmp.eq.s32.totalorder %s21, 1
      %p103 = por %p101, %p102
      %p104 = scmp.ne.s32.totalorder %s93, %s94
      %p105 = scmp.eq.s32.totalorder %s21, 0
      %p106 = por %p104, %p105
      %p107 = scmp.ne.s32.totalorder %s93, %s94
      %p108 = scmp.eq.s32.totalorder %s22, 1
      %p109 = por %p107, %p108
      %p111 = scmp.ne.s32.totalorder %s94, %s110
      %p112 = scmp.eq.s32.totalorder %s22, 0
      %p113 = por %p111, %p112
      %s114 = ssub.s32 %s23, %s35
      %p115 = scmp.eq.s32.totalorder %s114, 0
      %s117 = sadd.s32 %s116, 1
      %s118 = scalar_select %p115, %s116, %s117
      %p121 = pneg %p115
      %p122 = scmp.eq.s32.totalorder %s16, 1
      %p123 = por %p121, %p122
      %p124 = scmp.ne.s32.totalorder %s116, %s119
      %p125 = scmp.eq.s32.totalorder %s16, 0
      %p126 = por %p124, %p125
      %p127 = scmp.ne.s32.totalorder %s116, %s119
      %p128 = scmp.eq.s32.totalorder %s21, 1
      %p129 = por %p127, %p128
      %p130 = scmp.ne.s32.totalorder %s119, %s120
      %p131 = scmp.eq.s32.totalorder %s21, 0
      %p132 = por %p130, %p131
      %p133 = scmp.ne.s32.totalorder %s119, %s120
      %p134 = scmp.eq.s32.totalorder %s22, 1
      %p135 = por %p133, %p134
      %p137 = scmp.ne.s32.totalorder %s120, %s136
      %p138 = scmp.eq.s32.totalorder %s22, 0
      %p139 = por %p137, %p138
      %p140 = scmp.le.s32.totalorder 1, %s16
      %p141 = scmp.lt.s32.totalorder %s16, 3
      %p142 = pnand %p140, %p141
      %p143 = pneg %p142
      // Predicated region
      $region9: #{tpu_custom_call.1} parent=5 // pred_check
        _
      $region10: #{tpu_custom_call.1} parent=5 // pred_check_branch
        %145 = sbr.rel (%p142) target = $region12
      $region11: #{tpu_custom_call.1} parent=5 // pred_region
        %s146 = ssub.s32 %s16, 1
        // Predicated region
        $region13: #{tpu_custom_call.1} parent=11 // pred_check
          %p147 = pneg %p80
        $region14: #{tpu_custom_call.1} parent=11 // pred_check_branch
          %149 = sbr.rel (%p147) target = $region16
        $region15: #{tpu_custom_call.1} parent=11 // pred_region
          %s150 = smul.u32 16, %s26
          %s152 = ssub.s32 1024, 1024
          %153 = vsyncadd [#allocation9], %s152
          %s154 = smul.addr %s150, 64
          %s155 = scalar_lea.hbm %s1, %s154
          %s156 = sshll.u32 [#allocation8], 4
          %s157 = int_to_ptr.vmem [resolvable:$true] %s156
          %162 = dma.hbm_to_vmem [thread:$0]  %s155, 1024, %s157, [#allocation9], 64, 64, 4
        $region16: #{tpu_custom_call.1} parent=11 // pred_fallthru
          _
        // Predicated region
        $region17: #{tpu_custom_call.1} parent=11 // pred_check
          %p163 = pneg %p106
        $region18: #{tpu_custom_call.1} parent=11 // pred_check_branch
          %165 = sbr.rel (%p163) target = $region20
        $region19: #{tpu_custom_call.1} parent=11 // pred_region
          %p166 = scmp.lt.s32.totalorder %s26, 0
          %s167 = scalar_select %p166, %s26, 0
          %s168 = scalar_lea.vmem %s2, %s167
        $region20: #{tpu_custom_call.1} parent=11 // pred_fallthru
          _
      $region12: #{tpu_custom_call.1} parent=5 // pred_fallthru
        _
      %p169 = scmp.lt.s32.totalorder %s16, 2
      // Predicated region
      $region21: #{tpu_custom_call.1} parent=5 // pred_check
        %p170 = pneg %p169
      $region22: #{tpu_custom_call.1} parent=5 // pred_check_branch
        %172 = sbr.rel (%p170) target = $region24
      $region23: #{tpu_custom_call.1} parent=5 // pred_region
        // Predicated region
        $region25: #{tpu_custom_call.1} parent=23 // pred_check
          %p173 = pneg %p48
        $region26: #{tpu_custom_call.1} parent=23 // pred_check_branch
          %175 = sbr.rel (%p173) target = $region28
        $region27: #{tpu_custom_call.1} parent=23 // pred_region
          %s176 = sand.u32 %s38, 1
          %s177 = scalar_lea.sflag [#allocation6], %s176
          %s178 = sand.u32 %s38, 1
          %s179 = smul.addr %s178, 8
          %s180 = scalar_lea.vmem [#allocation5], %s179
          %s182 = ssub.s32 128, 128
          %183 = vsyncadd %s177, %s182
          %s184 = smul.addr %s23, 128
          %s185 = scalar_lea.hbm %s0, %s184
          %s187 = sshll.u32 %s180, 4
          %s188 = int_to_ptr.vmem [resolvable:$true] %s187
          %190 = dma.hbm_to_vmem [thread:$0]  %s185, 128, %s188, %s177
        $region28: #{tpu_custom_call.1} parent=23 // pred_fallthru
          _
      $region24: #{tpu_custom_call.1} parent=5 // pred_fallthru
        _
      %p191 = scmp.le.s32.totalorder 1, %s16
      %p192 = scmp.lt.s32.totalorder %s16, 3
      %p193 = pnand %p191, %p192
      %p194 = pneg %p193
      // Predicated region
      $region29: #{tpu_custom_call.1} parent=5 // pred_check
        _
      $region30: #{tpu_custom_call.1} parent=5 // pred_check_branch
        %196 = sbr.rel (%p193) target = $region32
      $region31: #{tpu_custom_call.1} parent=5 // pred_region
        %s197 = ssub.s32 %s16, 1
        %s198 = sand.u32 %s41, 1
        %s199 = scalar_lea.sflag [#allocation6], %s198
        %s200 = sand.u32 %s41, 1
        %s201 = smul.addr %s200, 8
        %s202 = scalar_lea.vmem [#allocation5], %s201
        // Predicated region
        $region33: #{tpu_custom_call.1} parent=31 // pred_check
          %p203 = pneg %p54
        $region34: #{tpu_custom_call.1} parent=31 // pred_check_branch
          %205 = sbr.rel (%p203) target = $region36
        $region35: #{tpu_custom_call.1} parent=31 // pred_region
          %206 = dma.done %s199, 128
        $region36: #{tpu_custom_call.1} parent=31 // pred_fallthru
          _
        // Predicated region
        $region37: #{tpu_custom_call.1} parent=31 // pred_check
          %p207 = pneg %p80
        $region38: #{tpu_custom_call.1} parent=31 // pred_check_branch
          %209 = sbr.rel (%p207) target = $region40
        $region39: #{tpu_custom_call.1} parent=31 // pred_region
          %210 = dma.done [#allocation9], 1024
        $region40: #{tpu_custom_call.1} parent=31 // pred_fallthru
          _
        %s211 = sand.u32 %s41, 1
        %s212 = scalar_lea.sflag [#allocation6], %s211
        %s213 = sand.u32 %s41, 1
        %s214 = smul.addr %s213, 8
        %s215 = scalar_lea.vmem [#allocation5], %s214
        %p216 = pneg %p54
        %p217 = pneg %p51
        %p218 = pneg %p80
        %p219 = pneg %p77
        %p220 = scmp.lt.s32.totalorder %s26, 0
        %s221 = scalar_select %p220, %s26, 0
        %s222 = scalar_lea.vmem %s2, %s221
        %p223 = pneg %p106
        %p224 = pneg %p103
        %p225 = pneg %p132
        %p226 = pneg %p129
        %s227 = sand.u32 %s119, 1
        %s228 = scalar_lea.sflag [#allocation7], %s227
        %s229 = sand.u32 %s119, 1
        %s230 = smul.addr %s229, 8
        %s231 = scalar_lea.vmem [#allocation10], %s230
        %s232 = smul.u32 16, %s26
        %p233 = scmp.lt.s32.totalorder %s26, 0
        %s234 = scalar_select %p233, %s26, 0
        %s235 = scalar_lea.vmem %s2, %s234
        %p237 = scmp.eq.s32.totalorder %s26, 0
        // Predicated region
        $region41: #{tpu_custom_call.1} parent=31 // pred_check
          %p238 = pneg %p237
        $region42: #{tpu_custom_call.1} parent=31 // pred_check_branch
          %240 = sbr.rel (%p238) target = $region44
        $region43: #{tpu_custom_call.1} parent=31 // pred_region
          %vm241 = vcmask 7168
          %242 = vst.msk [vmem:[#allocation2] sm:$0xff] %vm241, -inf
          %243 = vst.msk [vmem:[#allocation3] sm:$0xff] %vm241, 0.0
          %244 = vst [vmem:[#allocation4] sm:$0xff] 0.0
        $region44: #{tpu_custom_call.1} parent=31 // pred_fallthru
          _
        %v245 = vld [vmem:[%s202] sm:$0xff]
        %v246 = vpack.c.bf16 %v245, %v245
        %v247 = vld [vmem:[#allocation8] sm:$0xf]
        %v248 = vld [vmem:[#allocation8 + $0x4] sm:$0xf]
        %v249 = vld [vmem:[#allocation8 + $0x8] sm:$0xf]
        %v250 = vld [vmem:[#allocation8 + $0xc] sm:$0xf]
        %v251 = vld [vmem:[#allocation8 + $0x10] sm:$0xf]
        %v252 = vld [vmem:[#allocation8 + $0x14] sm:$0xf]
        %v253 = vld [vmem:[#allocation8 + $0x18] sm:$0xf]
        %v254 = vld [vmem:[#allocation8 + $0x1c] sm:$0xf]
        %v255 = vld [vmem:[#allocation8 + $0x20] sm:$0xf]
        %v256 = vld [vmem:[#allocation8 + $0x24] sm:$0xf]
        %v257 = vld [vmem:[#allocation8 + $0x28] sm:$0xf]
        %v258 = vld [vmem:[#allocation8 + $0x2c] sm:$0xf]
        %v259 = vld [vmem:[#allocation8 + $0x30] sm:$0xf]
        %v260 = vld [vmem:[#allocation8 + $0x34] sm:$0xf]
        %v261 = vld [vmem:[#allocation8 + $0x38] sm:$0xf]
        %v262 = vld [vmem:[#allocation8 + $0x3c] sm:$0xf]
        %v263 = vld [vmem:[%s235] sm:$0x1]
        %v265 = vlaneseq
        %v266 = vshrl.u32 %v265, 7
        %v267 = vsub.s32 0, %v266
        %v268 = vrot.slane %v263, %v267
        %v286 = vunpack.c.l.b16 %v247
        %v287 = vunpack.c.l.b16 %v248
        %v288 = vunpack.c.l.b16 %v249
        %v289 = vunpack.c.l.b16 %v250
        %v290 = vunpack.c.l.b16 %v251
        %v291 = vunpack.c.l.b16 %v252
        %v292 = vunpack.c.l.b16 %v253
        %v293 = vunpack.c.l.b16 %v254
        %v294 = vunpack.c.l.b16 %v255
        %v295 = vunpack.c.l.b16 %v256
        %v296 = vunpack.c.l.b16 %v257
        %v297 = vunpack.c.l.b16 %v258
        %v298 = vunpack.c.l.b16 %v259
        %v299 = vunpack.c.l.b16 %v260
        %v300 = vunpack.c.l.b16 %v261
        %v301 = vunpack.c.l.b16 %v262
        %v302 = vpack.c.b16 %v287, %v286
        %v303 = vpack.c.b16 %v289, %v288
        %v304 = vpack.c.b16 %v291, %v290
        %v305 = vpack.c.b16 %v293, %v292
        %v306 = vpack.c.b16 %v295, %v294
        %v307 = vpack.c.b16 %v297, %v296
        %v308 = vpack.c.b16 %v299, %v298
        %v309 = vpack.c.b16 %v301, %v300
        %318 = vmatprep.subr.bf16.mxu0 0
        %319 = vmatpush1.bf16.xpose.msra.mxu0 %v302
        %320 = vmatprep.subr.bf16.mxu0 0
        %321 = vmatpush1.bf16.xpose.msra.mxu0 %v303
        %322 = vmatprep.subr.bf16.mxu0 0
        %323 = vmatpush1.bf16.xpose.msra.mxu0 %v304
        %324 = vmatprep.subr.bf16.mxu0 0
        %325 = vmatpush1.bf16.xpose.msra.mxu0 %v305
        %326 = vmatprep.subr.bf16.mxu0 0
        %327 = vmatpush1.bf16.xpose.msra.mxu0 %v306
        %328 = vmatprep.subr.bf16.mxu0 0
        %329 = vmatpush1.bf16.xpose.msra.mxu0 %v307
        %330 = vmatprep.subr.bf16.mxu0 0
        %331 = vmatpush1.bf16.xpose.msra.mxu0 %v308
        %332 = vmatprep.subr.bf16.mxu0 0
        %333 = vmatpush1.bf16.xpose.msra.mxu0 %v309
        %334 = vmatprep.subr.bf16.mxu0 0
        %335 = vmatpush1.bf16.xpose.msra.mxu0 0
        %336 = vmatprep.subr.bf16.mxu0 0
        %337 = vmatpush1.bf16.xpose.msra.mxu0 0
        %338 = vmatprep.subr.bf16.mxu0 0
        %339 = vmatpush1.bf16.xpose.msra.mxu0 0
        %340 = vmatprep.subr.bf16.mxu0 0
        %341 = vmatpush1.bf16.xpose.msra.mxu0 0
        %342 = vmatprep.subr.bf16.mxu0 0
        %343 = vmatpush1.bf16.xpose.msra.mxu0 0
        %344 = vmatprep.subr.bf16.mxu0 0
        %345 = vmatpush1.bf16.xpose.msra.mxu0 0
        %346 = vmatprep.subr.bf16.mxu0 0
        %347 = vmatpush1.bf16.xpose.msra.mxu0 0
        %348 = vmatprep.subr.bf16.mxu0 0
        %349 = vmatpush1.bf16.xpose.msra.mxu0 0
        %350 = vmatprep.mubr.bf16.mxu0 0
        %351 = vmatmul.mubr.bf16.gmra.mrb[0].mxu0 %v246
        %v352 = vpop.f32.mrb[0].mxu0
        %v353 = vadd.f32 %v268, %v352
        %v354 = vpop.f32.mrb[0].mxu0
        %v355 = vpop.f32.mrb[0].mxu0
        %v356 = vpop.f32.mrb[0].mxu0
        %357 = vdwg.mxu0
        %v358 = vld [vmem:[#allocation2] sm:$0xff]
        %359 = vmax.xlane.f32.xlu0 %v353
        %v360 = vpop.xlane.xlu0 %359
        %v361 = vmax.f32 %v358, %v360
        %v362 = vsub.f32 %v358, %v361
        %v363 = vmul.f32 %v362, 1.442695
        %v364 = vpow.pop %v363
        %366 = vset.pattern.permute.xlu0 0
        %367 = vperm.xlu0 %366, %v361
        %v368 = vpop.permute.xlu0 %367
        %v370 = vsub.f32 %v353, %v368
        %v371 = vmul.f32 %v370, 1.442695
        %v372 = vpow.pop %v371
        %v373 = vld [vmem:[#allocation3] sm:$0xff]
        %v374 = vmul.f32 %v364, %v373
        %375 = vadd.xlane.f32.xlu0 %v372
        %v376 = vpop.xlane.xlu0 %375
        %v377 = vadd.f32 %v374, %v376
        %vm378 = vcmask 7168
        %379 = vst.msk [vmem:[#allocation3] sm:$0xff] %vm378, %v377
        %v380 = vld [vmem:[#allocation4] sm:$0xff]
        %382 = vset.pattern.permute.xlu0 0
        %383 = vperm.xlu0 %382, %v364
        %v384 = vpop.permute.xlu0 %383
        %v386 = vmul.f32 %v384, %v380
        %v387 = vpack.c.bf16 %v372, %v372
        %388 = vmatprep.subr.bf16.mxu0 0
        %389 = vmatpush1.bf16.msra.mxu0 %v302
        %390 = vmatprep.subr.bf16.mxu0 0
        %391 = vmatpush1.bf16.msra.mxu0 %v303
        %392 = vmatprep.subr.bf16.mxu0 0
        %393 = vmatpush1.bf16.msra.mxu0 %v304
        %394 = vmatprep.subr.bf16.mxu0 0
        %395 = vmatpush1.bf16.msra.mxu0 %v305
        %396 = vmatprep.subr.bf16.mxu0 0
        %397 = vmatpush1.bf16.msra.mxu0 %v306
        %398 = vmatprep.subr.bf16.mxu0 0
        %399 = vmatpush1.bf16.msra.mxu0 %v307
        %400 = vmatprep.subr.bf16.mxu0 0
        %401 = vmatpush1.bf16.msra.mxu0 %v308
        %402 = vmatprep.subr.bf16.mxu0 0
        %403 = vmatpush1.bf16.msra.mxu0 %v309
        %404 = vmatprep.subr.bf16.mxu0 0
        %405 = vmatpush1.bf16.msra.mxu0 0
        %406 = vmatprep.subr.bf16.mxu0 0
        %407 = vmatpush1.bf16.msra.mxu0 0
        %408 = vmatprep.subr.bf16.mxu0 0
        %409 = vmatpush1.bf16.msra.mxu0 0
        %410 = vmatprep.subr.bf16.mxu0 0
        %411 = vmatpush1.bf16.msra.mxu0 0
        %412 = vmatprep.subr.bf16.mxu0 0
        %413 = vmatpush1.bf16.msra.mxu0 0
        %414 = vmatprep.subr.bf16.mxu0 0
        %415 = vmatpush1.bf16.msra.mxu0 0
        %416 = vmatprep.subr.bf16.mxu0 0
        %417 = vmatpush1.bf16.msra.mxu0 0
        %418 = vmatprep.subr.bf16.mxu0 0
        %419 = vmatpush1.bf16.msra.mxu0 0
        %420 = vmatprep.mubr.bf16.mxu0 0
        %421 = vmatmul.mubr.bf16.gmra.mrb[0].mxu0 %v387
        %v422 = vpop.f32.mrb[0].mxu0
        %v423 = vadd.f32 0.0, %v422
        %v424 = vpop.f32.mrb[0].mxu0
        %v425 = vpop.f32.mrb[0].mxu0
        %v426 = vpop.f32.mrb[0].mxu0
        %427 = vdwg.mxu0
        %v428 = vadd.f32 %v386, %v423
        %429 = vst [vmem:[#allocation4] sm:$0xff] %v428
        %430 = vst.msk [vmem:[#allocation2] sm:$0xff] %vm378, %v361
        // Predicated region
        $region45: #{tpu_custom_call.1} parent=31 // pred_check
          %p431 = pneg %p237
        $region46: #{tpu_custom_call.1} parent=31 // pred_check_branch
          %433 = sbr.rel (%p431) target = $region48
        $region47: #{tpu_custom_call.1} parent=31 // pred_region
          %v434 = vld [vmem:[#allocation3] sm:$0xff]
          %v435 = vrcp.pop %v434
          %v436 = vld [vmem:[#allocation4] sm:$0xff]
          %438 = vset.pattern.permute.xlu0 0
          %439 = vperm.xlu0 %438, %v435
          %v440 = vpop.permute.xlu0 %439
          %v442 = vmul.f32 %v436, %v440
          %v443 = vadd.f32 %v442, %v245
          %444 = vst [vmem:[%s231] sm:$0xff] %v443
        $region48: #{tpu_custom_call.1} parent=31 // pred_fallthru
          _
        %s445 = sand.u32 %s119, 1
        %s446 = scalar_lea.sflag [#allocation7], %s445
        %s447 = sand.u32 %s119, 1
        %s448 = smul.addr %s447, 8
        %s449 = scalar_lea.vmem [#allocation10], %s448
        // Predicated region
        $region49: #{tpu_custom_call.1} parent=31 // pred_check
          %p450 = pneg %p129
        $region50: #{tpu_custom_call.1} parent=31 // pred_check_branch
          %452 = sbr.rel (%p450) target = $region52
        $region51: #{tpu_custom_call.1} parent=31 // pred_region
          %s454 = ssub.s32 128, 128
          %455 = vsyncadd %s446, %s454
          %s456 = smul.addr %s25, 128
          %s457 = scalar_lea.hbm %s3, %s456
          %s459 = sshll.u32 %s449, 4
          %s460 = int_to_ptr.vmem [resolvable:$true] %s459
          %462 = dma.vmem_to_hbm [thread:$0]  %s460, 128, %s457, %s446
        $region52: #{tpu_custom_call.1} parent=31 // pred_fallthru
          _
      $region32: #{tpu_custom_call.1} parent=5 // pred_fallthru
        _
      %p463 = scmp.le.s32.totalorder 2, %s16
      // Predicated region
      $region53: #{tpu_custom_call.1} parent=5 // pred_check
        %p464 = pneg %p463
      $region54: #{tpu_custom_call.1} parent=5 // pred_check_branch
        %466 = sbr.rel (%p464) target = $region56
      $region55: #{tpu_custom_call.1} parent=5 // pred_region
        %s467 = ssub.s32 %s16, 2
        // Predicated region
        $region57: #{tpu_custom_call.1} parent=55 // pred_check
          %p468 = pneg %p135
        $region58: #{tpu_custom_call.1} parent=55 // pred_check_branch
          %470 = sbr.rel (%p468) target = $region60
        $region59: #{tpu_custom_call.1} parent=55 // pred_region
          %s471 = sand.u32 %s120, 1
          %s472 = scalar_lea.sflag [#allocation7], %s471
          %s473 = sand.u32 %s120, 1
          %s474 = smul.addr %s473, 8
          %s475 = scalar_lea.vmem [#allocation10], %s474
          %476 = dma.done %s472, 128
        $region60: #{tpu_custom_call.1} parent=55 // pred_fallthru
          _
      $region56: #{tpu_custom_call.1} parent=5 // pred_fallthru
        _
    $region6: #{tpu_custom_call.1} parent=1 // loop_footer
      %s20 = sadd.s32 1, %s16
    $region7: #{tpu_custom_call.1} parent=1 // loop_footer_branch
      %15 = sbr.rel target = $region3
    $region8: #{tpu_custom_call.1} parent=1 // loop_exit
      _
    %477 = vsyncpa [#allocation6], 1
    %s478 = scalar_lea.sflag [#allocation6], 1
    %479 = vsyncpa %s478, 1
    %480 = vsyncpa [#allocation9], 1
    %481 = vsyncpa [#allocation7], 1
    %s482 = scalar_lea.sflag [#allocation7], 1
    %483 = vsyncpa %s482, 1

</llo_original>
